<compile_context>
chip_gen: v7x
topology: tpu7x:2x2x1
jax: 0.10.0
libtpu: 0.0.40
codegen_flags: <defaults>
</compile_context>

<pallas_src>
import functools

import jax
import jax.numpy as jnp
from jax.experimental import pallas as pl
from jax.experimental.pallas import tpu as pltpu


def _round_up(x, m):
    return ((x + m - 1) // m) * m


def _vmem_caps():
    """(physical VMEM bytes, per-call vmem_limit_bytes) — generation aware."""
    try:
        cap = int(pltpu.get_tpu_info().vmem_capacity_bytes)
    except Exception:
        cap = 64 * 1024 * 1024  # conservative fallback (v7x-sized)
    # v5e/v6e: 128 MiB physical -> ~96 MiB limit; v7x: 64 MiB -> 48 MiB.
    limit = min(cap * 3 // 4, 100 * 1024 * 1024)
    return cap, limit


def _pick_tn(out_dim, wide_ok):
    # Wider (512) N tiles on 128-MiB-VMEM chips (v5e/v6e); 256 on v7x.
    if wide_ok and out_dim % 512 == 0:
        return 512
    for cand in (256, 128):
        if out_dim % cand == 0:
            return cand
    return out_dim  # full-extent escape of the (8,128) rule for tiny out_dim


def _pick_tk(in_dim, tn, tm, x_itemsize, w_itemsize, budget):
    """Largest K tile whose (double-buffered) blocks fit the VMEM budget."""

    def fits(tk):
        w_blk = 2 * (tk * 2 * tn) * w_itemsize   # weight slab, double-buffered
        x_blk = 2 * (tm * tk) * x_itemsize       # activation tile, double-buffered
        o_blk = 2 * (tm * tn) * 4                # output tile (<= f32)
        acc = (tm * 2 * tn) * 4                  # f32 accumulator (conservative)
        b_blk = 2 * (2 * tn) * 4                 # bias
        return w_blk + x_blk + o_blk + acc + b_blk <= budget

    if fits(in_dim):
        return in_dim                            # no K split needed
    for cand in (2048, 1024, 512, 256, 128):
        if in_dim % cand == 0 and fits(cand):
            return cand
    # TODO(synk): pathological in_dim with no fitting 128-multiple divisor.
    return in_dim


def _gated_mlp_kernel(x_ref, w_ref, b_ref, o_ref):
    # x_ref: (tm, in_dim) original dtype; w_ref: (in_dim, 2*tn) compute dtype
    # (per-N-tile interleaved [value | gate]); b_ref: (1, 2*tn) f32; o_ref: (tm, tn).
    tn = o_ref.shape[-1]
    y = jnp.dot(x_ref[...].astype(w_ref.dtype), w_ref[...],
                preferred_element_type=jnp.float32)
    y = y + b_ref[...]
    o_ref[...] = (y[:, :tn] * jax.nn.sigmoid(y[:, tn:])).astype(o_ref.dtype)


def _gated_mlp_kernel_ktiled(x_ref, w_ref, b_ref, o_ref, acc_ref):
    # Same as above but with an in_dim (K) grid axis: f32 accumulation in VMEM
    # scratch, bias + gating epilogue on the last K step.
    k = pl.program_id(2)

    @pl.when(k == 0)
    def _():
        acc_ref[...] = jnp.zeros_like(acc_ref)

    acc_ref[...] += jnp.dot(x_ref[...].astype(w_ref.dtype), w_ref[...],
                            preferred_element_type=jnp.float32)

    @pl.when(k == pl.num_programs(2) - 1)
    def _():
        tn = o_ref.shape[-1]
        y = acc_ref[...] + b_ref[...]
        o_ref[...] = (y[:, :tn] * jax.nn.sigmoid(y[:, tn:])).astype(o_ref.dtype)


def prepare_gated_mlp_params(weight, bias, *, tn=None, compute_dtype=jnp.bfloat16):
    """One-time re-layout of PyTorch nn.Linear(in_dim, 2*out_dim) parameters.

    weight: (2*out_dim, in_dim) PyTorch layout; rows [:out_dim] = value half,
            rows [out_dim:] = gate half.  bias: (2*out_dim,)
    Returns (wf, bf, tn): wf is (in_dim, 2*out_dim) with, for each N-tile j of
    width tn, columns [value_j | gate_j]; bf is (1, 2*out_dim) f32 with the
    same interleave.  Do this once, outside the per-call path.
    """
    two_out, in_dim = weight.shape
    out_dim = two_out // 2
    if tn is None:
        cap, _ = _vmem_caps()
        tn = _pick_tn(out_dim, wide_ok=cap >= 96 * 1024 * 1024)
    assert out_dim % tn == 0, "tn must divide out_dim"
    nt = out_dim // tn

    w_t = jnp.asarray(weight).T                           # (in_dim, 2*out_dim)
    w_val = w_t[:, :out_dim].reshape(in_dim, nt, tn)      # value half (x1)
    w_gate = w_t[:, out_dim:].reshape(in_dim, nt, tn)     # gate half  (x2)
    wf = jnp.concatenate([w_val, w_gate], axis=2)         # (in_dim, nt, 2*tn)
    wf = wf.reshape(in_dim, 2 * out_dim).astype(compute_dtype)

    b = jnp.asarray(bias)
    b_val = b[:out_dim].reshape(nt, tn)
    b_gate = b[out_dim:].reshape(nt, tn)
    bf = jnp.concatenate([b_val, b_gate], axis=1).reshape(1, 2 * out_dim)
    bf = bf.astype(jnp.float32)                           # bias stays f32
    return wf, bf, int(tn)


def gated_mlp_block(x, wf, bf, *, tn, tm=256, tk=None, out_dtype=None):
    """Forward of GatedMLPBlock (layer_norm=False) with prepared params.

    x:  (batch, seq, in_dim); wf: (in_dim, 2*out_dim) interleaved weight;
    bf: (1, 2*out_dim) f32 interleaved bias.  Returns (batch, seq, out_dim).
    """
    batch, seq, in_dim = x.shape
    assert wf.shape[0] == in_dim
    out_dim = wf.shape[1] // 2
    assert out_dim % tn == 0
    num_n = out_dim // tn
    out_dtype = x.dtype if out_dtype is None else out_dtype

    M = batch * seq
    x2d = x.reshape(M, in_dim)  # free: contiguous leading-dim merge, no copy

    w_itemsize = jnp.dtype(wf.dtype).itemsize
    x_itemsize = jnp.dtype(x2d.dtype).itemsize

    # Only pay a wrapper-side cast (one extra HBM pass) when x will be
    # re-streamed many times by the n-outer grid; otherwise cast the (tm, tk)
    # tile inside the kernel for free.
    if num_n >= 3 and x_itemsize > w_itemsize:
        x2d = x2d.astype(wf.dtype)
        x_itemsize = w_itemsize

    # bf16 packs two rows per sublane -> 16-row granularity; f32 -> 8.
    out_itemsize = jnp.dtype(out_dtype).itemsize
    row_mult = 16 if min(w_itemsize, x_itemsize, out_itemsize) == 2 else 8
    tm_eff = min(tm, _round_up(M, row_mult))
    M_pad = _round_up(M, tm_eff)
    if M_pad != M:  # skipped in the common divisible case
        x2d = jnp.pad(x2d, ((0, M_pad - M), (0, 0)))
    num_m = M_pad // tm_eff

    cap, vmem_limit = _vmem_caps()
    if tk is None:
        tk = _pick_tk(in_dim, tn, tm_eff, x_itemsize, w_itemsize,
                      vmem_limit - 2 * 1024 * 1024)
    assert in_dim % tk == 0
    num_k = in_dim // tk

    # Grid ordering: weight slab outer (resident across all M tiles) when the
    # weight is the larger HBM stream; also guarantees a leading parallel axis
    # of extent >= 2 for v7x's two TensorCores in that regime.
    weight_bytes = wf.size * w_itemsize
    act_bytes = M_pad * in_dim * x_itemsize
    n_outer = (num_n >= 2) and (weight_bytes >= act_bytes)

    if num_k == 1:
        kernel = _gated_mlp_kernel
        scratch = []
        if n_outer:
            grid = (num_n, num_m)
            x_map = lambda j, i: (i, 0)
            w_map = lambda j, i: (0, j)
            b_map = lambda j, i: (0, j)
            o_map = lambda j, i: (i, j)
        else:
            grid = (num_m, num_n)
            x_map = lambda i, j: (i, 0)
            w_map = lambda i, j: (0, j)
            b_map = lambda i, j: (0, j)
            o_map = lambda i, j: (i, j)
        in_specs = [
            pl.BlockSpec((tm_eff, in_dim), x_map),
            pl.BlockSpec((in_dim, 2 * tn), w_map),
            pl.BlockSpec((1, 2 * tn), b_map),
        ]
        semantics = ("parallel", "parallel")
    else:
        kernel = _gated_mlp_kernel_ktiled
        scratch = [pltpu.VMEM((tm_eff, 2 * tn), jnp.float32)]
        if n_outer:
            grid = (num_n, num_m, num_k)
            x_map = lambda j, i, k: (i, k)
            w_map = lambda j, i, k: (k, j)
            b_map = lambda j, i, k: (0, j)
            o_map = lambda j, i, k: (i, j)
        else:
            grid = (num_m, num_n, num_k)
            x_map = lambda i, j, k: (i, k)
            w_map = lambda i, j, k: (k, j)
            b_map = lambda i, j, k: (0, j)
            o_map = lambda i, j, k: (i, j)
        in_specs = [
            pl.BlockSpec((tm_eff, tk), x_map),
            pl.BlockSpec((tk, 2 * tn), w_map),
            pl.BlockSpec((1, 2 * tn), b_map),
        ]
        semantics = ("parallel", "parallel", "arbitrary")

    out2d = pl.pallas_call(
        kernel,
        out_shape=jax.ShapeDtypeStruct((M_pad, out_dim), out_dtype),
        grid_spec=pltpu.PrefetchScalarGridSpec(
            num_scalar_prefetch=0,
            grid=grid,
            in_specs=in_specs,
            out_specs=pl.BlockSpec((tm_eff, tn), o_map),
            scratch_shapes=scratch,
        ),
        compiler_params=pltpu.CompilerParams(
            dimension_semantics=semantics,
            vmem_limit_bytes=vmem_limit,
        ),
    )(x2d, wf, bf)

    if M_pad != M:
        out2d = out2d[:M]
    return out2d.reshape(batch, seq, out_dim)


if __name__ == "__main__":
    # ---- small shapes matching the module spec ----
    batch, seq, in_dim, out_dim = 2, 8, 32, 32
    key = jax.random.PRNGKey(0)
    kx, kw, kb = jax.random.split(key, 3)

    bound = 1.0 / (in_dim ** 0.5)
    weight = jax.random.uniform(kw, (2 * out_dim, in_dim), jnp.float32, -bound, bound)
    bias = jax.random.uniform(kb, (2 * out_dim,), jnp.float32, -bound, bound)
    x = jax.random.normal(kx, (batch, seq, in_dim), jnp.float32)

    # Pure-JAX reference of the PyTorch forward (layer_norm=False).
    y = x @ weight.T + bias
    ref = y[..., :out_dim] * jax.nn.sigmoid(y[..., out_dim:])

    # bf16 compute path (f32 accumulation + f32 epilogue).
    wf, bf, tn = prepare_gated_mlp_params(weight, bias, compute_dtype=jnp.bfloat16)
    fwd = jax.jit(functools.partial(gated_mlp_block, tn=tn))
    out = jax.block_until_ready(fwd(x, wf, bf))
    assert out.shape == (batch, seq, out_dim)
    assert jnp.allclose(out, ref, atol=2e-2, rtol=2e-2), float(jnp.max(jnp.abs(out - ref)))

    # f32 compute path: tight-tolerance check of the same kernel.
    wf32, bf32, tn32 = prepare_gated_mlp_params(weight, bias, compute_dtype=jnp.float32)
    out32 = jax.block_until_ready(gated_mlp_block(x, wf32, bf32, tn=tn32))
    assert jnp.allclose(out32, ref, atol=1e-5, rtol=1e-5)

    # ---- larger shapes exercising the n-outer grid + K-tiled accumulator ----
    b2, s2, in2, out2 = 2, 256, 1024, 512
    k2x, k2w, k2b = jax.random.split(jax.random.PRNGKey(1), 3)
    bound2 = 1.0 / (in2 ** 0.5)
    w2 = jax.random.uniform(k2w, (2 * out2, in2), jnp.float32, -bound2, bound2)
    bias2 = jax.random.uniform(k2b, (2 * out2,), jnp.float32, -bound2, bound2)
    x2 = jax.random.normal(k2x, (b2, s2, in2), jnp.float32)
    y2 = x2 @ w2.T + bias2
    ref2 = y2[..., :out2] * jax.nn.sigmoid(y2[..., out2:])

    # f32 compute, forced K split (tk=256) -> accumulator/epilogue path, tight check.
    wf2, bf2, tn2 = prepare_gated_mlp_params(w2, bias2, tn=256, compute_dtype=jnp.float32)
    out2_f32 = jax.block_until_ready(gated_mlp_block(x2, wf2, bf2, tn=tn2, tk=256))
    assert jnp.allclose(out2_f32, ref2, atol=1e-4, rtol=1e-4)

    # bf16 compute, bf16 output (halved output HBM writes), auto tiling.
    wf2b, bf2b, tn2b = prepare_gated_mlp_params(w2, bias2, tn=256,
                                                compute_dtype=jnp.bfloat16)
    out2_bf16 = jax.block_until_ready(
        gated_mlp_block(x2, wf2b, bf2b, tn=tn2b, out_dtype=jnp.bfloat16))
    assert out2_bf16.dtype == jnp.bfloat16
    assert jnp.allclose(out2_bf16.astype(jnp.float32), ref2, atol=5e-2, rtol=5e-2)

    print("KERNEL_OK")
</pallas_src>

<mosaic_0001>
module attributes {stable_mosaic.version = 11 : i64} {
  func.func @_gated_mlp_kernel(%arg0: i32, %arg1: i32, %arg2: memref<16x32xf32, #tpu.memory_space<vmem>>, %arg3: memref<32x64xbf16, #tpu.memory_space<vmem>>, %arg4: memref<1x64xf32, #tpu.memory_space<vmem>>, %arg5: memref<16x32xf32, #tpu.memory_space<vmem>>) attributes {dimension_semantics = [#tpu.dimension_semantics<parallel>, #tpu.dimension_semantics<parallel>], iteration_bounds = array<i64: 1, 1>, scalar_prefetch = 0 : i64, scratch_operands = 0 : i64, tpu.core_type = #tpu.core_type<tc>, window_params = [{transform_indices = @transform_0, window_bounds = array<i64: 16, 32>}, {transform_indices = @transform_1, window_bounds = array<i64: 32, 64>}, {transform_indices = @transform_2, window_bounds = array<i64: 1, 64>}, {transform_indices = @transform_3, window_bounds = array<i64: 16, 32>}]} {
    %c0 = arith.constant 0 : index
    %c0_0 = arith.constant 0 : index
    %0 = vector.load %arg2[%c0, %c0_0] : memref<16x32xf32, #tpu.memory_space<vmem>>, vector<16x32xf32>
    %1 = arith.truncf %0 : vector<16x32xf32> to vector<16x32xbf16>
    %c0_1 = arith.constant 0 : index
    %c0_2 = arith.constant 0 : index
    %2 = vector.load %arg3[%c0_1, %c0_2] : memref<32x64xbf16, #tpu.memory_space<vmem>>, vector<32x64xbf16>
    %cst = arith.constant dense<0.000000e+00> : vector<16x64xf32>
    %3 = tpu.matmul %1, %2, %cst {dimension_numbers = #tpu.dot_dimension_numbers<[1], [0], [0], [1], [0, 0, 1, 1], [], []>} : vector<16x32xbf16>, vector<32x64xbf16>, vector<16x64xf32> -> vector<16x64xf32>
    %c0_3 = arith.constant 0 : index
    %c0_4 = arith.constant 0 : index
    %4 = vector.load %arg4[%c0_3, %c0_4] : memref<1x64xf32, #tpu.memory_space<vmem>>, vector<1x64xf32>
    %5 = vector.broadcast %4 : vector<1x64xf32> to vector<16x64xf32>
    %6 = arith.addf %3, %5 : vector<16x64xf32>
    %7 = vector.extract_strided_slice %6 {offsets = [0, 0], sizes = [16, 32], strides = [1, 1]} : vector<16x64xf32> to vector<16x32xf32>
    %8 = vector.extract_strided_slice %6 {offsets = [0, 32], sizes = [16, 32], strides = [1, 1]} : vector<16x64xf32> to vector<16x32xf32>
    %9 = arith.negf %8 : vector<16x32xf32>
    %10 = math.exp %9 : vector<16x32xf32>
    %cst_5 = arith.constant 1.000000e+00 : f32
    %11 = vector.broadcast %cst_5 : f32 to vector<16x32xf32>
    %12 = arith.addf %11, %10 : vector<16x32xf32>
    %13 = arith.divf %11, %12 : vector<16x32xf32>
    %14 = arith.mulf %7, %13 : vector<16x32xf32>
    %c0_6 = arith.constant 0 : index
    %c0_7 = arith.constant 0 : index
    %15 = vector.load %arg5[%c0_6, %c0_7] : memref<16x32xf32, #tpu.memory_space<vmem>>, vector<16x32xf32>
    tpu.vector_store %arg5[%c0_6, %c0_7], %14 {strides = array<i32>} : memref<16x32xf32, #tpu.memory_space<vmem>>, vector<16x32xf32>,
    return
  }
  func.func @transform_0(%arg0: i32, %arg1: i32) -> (i32, i32) {
    %c0_i32 = arith.constant 0 : i32
    %c0_i32_0 = arith.constant 0 : i32
    return %arg0, %c0_i32 : i32, i32
  }
  func.func @transform_1(%arg0: i32, %arg1: i32) -> (i32, i32) {
    %c0_i32 = arith.constant 0 : i32
    %c0_i32_0 = arith.constant 0 : i32
    return %c0_i32, %arg1 : i32, i32
  }
  func.func @transform_2(%arg0: i32, %arg1: i32) -> (i32, i32) {
    %c0_i32 = arith.constant 0 : i32
    %c0_i32_0 = arith.constant 0 : i32
    return %c0_i32, %arg1 : i32, i32
  }
  func.func @transform_3(%arg0: i32, %arg1: i32) -> (i32, i32) {
    %c0_i32 = arith.constant 0 : i32
    return %arg0, %arg1 : i32, i32
  }
}

</mosaic_0001>

<llo_original>
// kernel: gated_mlp_block.1
$region0: #{gated_mlp_block.1}
  #allocation0 [shape = 'u32[]', space=smem, size = 0x4, offset = 0x4, fixed_abs, tag = 'smem constant byte address 0x4 - core index']
  #allocation1 [shape = 'u32[144,128]{1,0:T(1,128)}', space=vmem, size = 0x12000, scoped, tag = 'internal scratch']
  %s0 = inlined_call_operand.hbm [shape: f32[16,32], index: 0, kind: input, shape index: {}]
  %s1 = inlined_call_operand.hbm [shape: bf16[32,64], index: 1, kind: input, shape index: {}]
  %s2 = inlined_call_operand.vmem [shape: f32[1,64], index: 2, kind: input, shape index: {}]
  %s3 = inlined_call_operand.hbm [shape: f32[16,32], index: 3, kind: output, shape index: {}]
  %s4 = sld [smem:[#allocation0]]
  $region30: #{gated_mlp_block.1} parent=0
    _
  %s6 = ssub.s32 1, %s4
  %s7 = scalar_select 0, %s6, %s4
  $region1: #{gated_mlp_block.1} parent=0
    #allocation2 [shape = 'u8[8192]{0}', space=vmem, size = 0x2000, scoped, tag = 'input window, operand 0, single buffered']
    #allocation3 [shape = 's32[1]{0}', space=sflag, size = 0x4, scoped, tag = 'scoped memory for gated_mlp_block.1']
    #allocation4 [shape = 's32[1]{0}', space=sflag, size = 0x4, scoped, tag = 'scoped memory for gated_mlp_block.1']
    #allocation5 [shape = 'u8[8192]{0}', space=vmem, size = 0x2000, scoped, tag = 'input window, operand 1, single buffered']
    #allocation6 [shape = 's32[1]{0}', space=sflag, size = 0x4, scoped, tag = 'scoped memory for gated_mlp_block.1']
    #allocation7 [shape = 'u8[8192]{0}', space=vmem, size = 0x2000, scoped, tag = 'output window, operand 0, single buffered']
    %8 = vsyncpa [#allocation3], 0
    %9 = vsyncpa [#allocation6], 0
    %10 = vsyncpa [#allocation4], 0
    // Predicated region
    $region2: #{gated_mlp_block.1} parent=1 // pred_check
      _
    $region3: #{gated_mlp_block.1} parent=1 // pred_check_branch
      %12 = sbr.rel (0) target = $region5
    $region4: #{gated_mlp_block.1} parent=1 // pred_region
      %s14 = ssub.s32 256, 256
      %15 = vsyncadd [#allocation3], %s14
      %s16 = sshll.u32 [#allocation2], 4
      %s17 = int_to_ptr.vmem [resolvable:$true] %s16
      %22 = dma.hbm_to_vmem [thread:$0]  %s0, 256, %s17, [#allocation3], 128, 128, 8
    $region5: #{gated_mlp_block.1} parent=1 // pred_fallthru
      _
    // Predicated region
    $region6: #{gated_mlp_block.1} parent=1 // pred_check
      _
    $region7: #{gated_mlp_block.1} parent=1 // pred_check_branch
      %24 = sbr.rel (0) target = $region9
    $region8: #{gated_mlp_block.1} parent=1 // pred_region
      %s26 = ssub.s32 256, 256
      %27 = vsyncadd [#allocation6], %s26
      %s28 = sshll.u32 [#allocation5], 4
      %s29 = int_to_ptr.vmem [resolvable:$true] %s28
      %34 = dma.hbm_to_vmem [thread:$0]  %s1, 256, %s29, [#allocation6], 64, 64, 4
    $region9: #{gated_mlp_block.1} parent=1 // pred_fallthru
      _
    // Predicated region
    $region10: #{gated_mlp_block.1} parent=1 // pred_check
      _
    $region11: #{gated_mlp_block.1} parent=1 // pred_check_branch
      %36 = sbr.rel (0) target = $region13
    $region12: #{gated_mlp_block.1} parent=1 // pred_region
      _
    $region13: #{gated_mlp_block.1} parent=1 // pred_fallthru
      _
    // Predicated region
    $region14: #{gated_mlp_block.1} parent=1 // pred_check
      _
    $region15: #{gated_mlp_block.1} parent=1 // pred_check_branch
      %38 = sbr.rel (0) target = $region17
    $region16: #{gated_mlp_block.1} parent=1 // pred_region
      %39 = dma.done [#allocation3], 256
    $region17: #{gated_mlp_block.1} parent=1 // pred_fallthru
      _
    // Predicated region
    $region18: #{gated_mlp_block.1} parent=1 // pred_check
      _
    $region19: #{gated_mlp_block.1} parent=1 // pred_check_branch
      %41 = sbr.rel (0) target = $region21
    $region20: #{gated_mlp_block.1} parent=1 // pred_region
      %42 = dma.done [#allocation6], 256
    $region21: #{gated_mlp_block.1} parent=1 // pred_fallthru
      _
    %v44 = vld [vmem:[#allocation2] sm:$0xff]
    %v45 = vld [vmem:[#allocation2 + $0x8] sm:$0xff]
    %v46 = vpack.c.bf16 %v45, %v44
    %v47 = vld [vmem:[#allocation5] sm:$0xf]
    %v48 = vld [vmem:[#allocation5 + $0x4] sm:$0xf]
    %v49 = vld [vmem:[#allocation5 + $0x8] sm:$0xf]
    %v50 = vld [vmem:[#allocation5 + $0xc] sm:$0xf]
    %v51 = vld [vmem:[%s2] sm:$0x1]
    %v53 = vlaneseq
    %v54 = vshrl.u32 %v53, 7
    %v55 = vsub.s32 0, %v54
    %v56 = vrot.slane %v51, %v55
    %v62 = vunpack.c.l.b16 %v47
    %v63 = vunpack.c.l.b16 %v48
    %v64 = vunpack.c.l.b16 %v49
    %v65 = vunpack.c.l.b16 %v50
    %v66 = vpack.c.b16 %v63, %v62
    %v67 = vpack.c.b16 %v65, %v64
    %vm70 = vcmask 261120
    %v72 = vsel %vm70, %v46, 0
    %74 = vmatprep.subr.bf16.mxu0 0
    %75 = vmatpush1.bf16.msra.mxu0 %v66
    %76 = vmatprep.subr.bf16.mxu0 0
    %77 = vmatpush1.bf16.msra.mxu0 %v67
    %78 = vmatprep.subr.bf16.mxu0 0
    %79 = vmatpush1.bf16.msra.mxu0 0
    %80 = vmatprep.subr.bf16.mxu0 0
    %81 = vmatpush1.bf16.msra.mxu0 0
    %82 = vmatprep.subr.bf16.mxu0 0
    %83 = vmatpush1.bf16.msra.mxu0 0
    %84 = vmatprep.subr.bf16.mxu0 0
    %85 = vmatpush1.bf16.msra.mxu0 0
    %86 = vmatprep.subr.bf16.mxu0 0
    %87 = vmatpush1.bf16.msra.mxu0 0
    %88 = vmatprep.subr.bf16.mxu0 0
    %89 = vmatpush1.bf16.msra.mxu0 0
    %90 = vmatprep.subr.bf16.mxu0 0
    %91 = vmatpush1.bf16.msra.mxu0 0
    %92 = vmatprep.subr.bf16.mxu0 0
    %93 = vmatpush1.bf16.msra.mxu0 0
    %94 = vmatprep.subr.bf16.mxu0 0
    %95 = vmatpush1.bf16.msra.mxu0 0
    %96 = vmatprep.subr.bf16.mxu0 0
    %97 = vmatpush1.bf16.msra.mxu0 0
    %98 = vmatprep.subr.bf16.mxu0 0
    %99 = vmatpush1.bf16.msra.mxu0 0
    %100 = vmatprep.subr.bf16.mxu0 0
    %101 = vmatpush1.bf16.msra.mxu0 0
    %102 = vmatprep.subr.bf16.mxu0 0
    %103 = vmatpush1.bf16.msra.mxu0 0
    %104 = vmatprep.subr.bf16.mxu0 0
    %105 = vmatpush1.bf16.msra.mxu0 0
    %106 = vmatprep.mubr.bf16.mxu0 0
    %107 = vmatmul.mubr.bf16.gmra.mrb[0].mxu0 %v72
    %v108 = vpop.f32.mrb[0].mxu0
    %v109 = vadd.f32 %v56, %v108
    %v110 = vpop.f32.mrb[0].mxu0
    %v111 = vpop.f32.mrb[0].mxu0
    %v112 = vadd.f32 %v56, %v111
    %v113 = vpop.f32.mrb[0].mxu0
    %114 = vdwg.mxu0
    %v115 = vxor.u32 %v109, 2147483648
    %v116 = vxor.u32 %v112, 2147483648
    %v117 = vmul.f32 %v115, 1.442695
    %v118 = vpow.pop %v117
    %v119 = vmul.f32 %v116, 1.442695
    %v120 = vpow.pop %v119
    %v121 = vadd.f32 %v118, 1.0
    %v122 = vadd.f32 %v120, 1.0
    %v123 = vrcp.pop %v121
    %v124 = vmul.f32 1.0, %v123
    %v125 = vrcp.pop %v122
    %v126 = vmul.f32 1.0, %v125
    %129 = vrot.lane.b32.xlu0 %v124, 96
    %v130 = vpop.permute.xlu0 %129
    %131 = vrot.lane.b32.xlu0 %v126, 96
    %v132 = vpop.permute.xlu0 %131
    %v135 = vmul.f32 %v109, %v130
    %v136 = vmul.f32 %v112, %v132
    %137 = vst.msk [vmem:[#allocation7] sm:$0xff] %vm70, %v135
    %138 = vst.msk [vmem:[#allocation7 + $0x8] sm:$0xff] %vm70, %v136
    // Predicated region
    $region22: #{gated_mlp_block.1} parent=1 // pred_check
      _
    $region23: #{gated_mlp_block.1} parent=1 // pred_check_branch
      %140 = sbr.rel (0) target = $region25
    $region24: #{gated_mlp_block.1} parent=1 // pred_region
      %s142 = ssub.s32 256, 256
      %143 = vsyncadd [#allocation4], %s142
      %s144 = sshll.u32 [#allocation7], 4
      %s145 = int_to_ptr.vmem [resolvable:$true] %s144
      %150 = dma.vmem_to_hbm [thread:$0]  %s145, 256, %s3, [#allocation4], 128, 128, 8
    $region25: #{gated_mlp_block.1} parent=1 // pred_fallthru
      _
    // Predicated region
    $region26: #{gated_mlp_block.1} parent=1 // pred_check
      _
    $region27: #{gated_mlp_block.1} parent=1 // pred_check_branch
      %152 = sbr.rel (0) target = $region29
    $region28: #{gated_mlp_block.1} parent=1 // pred_region
      %153 = dma.done [#allocation4], 256
    $region29: #{gated_mlp_block.1} parent=1 // pred_fallthru
      _
    %154 = vsyncpa [#allocation3], 1
    %155 = vsyncpa [#allocation6], 1
    %156 = vsyncpa [#allocation4], 1

</llo_original>
